<compile_context>
chip_gen: v7x
topology: tpu7x:2x2x1
jax: 0.10.0
libtpu: 0.0.40
codegen_flags: <defaults>
</compile_context>

<pallas_src>
import math

import jax
import jax.numpy as jnp
from jax.experimental import pallas as pl
from jax.experimental.pallas import tpu as pltpu


_LANES = 512           # lane-dense last dim: multiple of 128 -> unmasked vst
_MAX_TILE_ROWS = 1024  # 1024 x 512 x f32 = 2 MiB per buffer per pipeline slot


def _round_up(n, m):
    return ((n + m - 1) // m) * m


def _copy_kernel(x_ref, o_ref):
    # Pure pass-through: forward(x) in the reference module does no compute.
    o_ref[...] = x_ref[...]


@jax.jit
def siamese_forward(x):
    """Pallas implementation of Siamese.forward (identity / no-op on x)."""
    orig_shape = x.shape
    total = math.prod(orig_shape)

    # Sublane alignment by element width (f32: 8, bf16: 16, int8/fp8: 32).
    sublane = {4: 8, 2: 16, 1: 32}.get(jnp.dtype(x.dtype).itemsize, 8)

    rows = (total + _LANES - 1) // _LANES
    tile_rows = min(_MAX_TILE_ROWS, _round_up(rows, sublane))
    rows_padded = _round_up(rows, tile_rows)
    padded_total = rows_padded * _LANES

    # Glue (plain JAX, fused under jit): flatten to a lane-dense 2-D slab,
    # zero-padding the ragged tail instead of asserting on odd sizes.
    flat = x.reshape(-1)
    if padded_total != total:
        flat = jnp.pad(flat, (0, padded_total - total))
    x2d = flat.reshape(rows_padded, _LANES)

    grid = (rows_padded // tile_rows,)

    out2d = pl.pallas_call(
        _copy_kernel,
        out_shape=jax.ShapeDtypeStruct((rows_padded, _LANES), x.dtype),
        grid=grid,
        in_specs=[pl.BlockSpec((tile_rows, _LANES), lambda i: (i, 0))],
        out_specs=pl.BlockSpec((tile_rows, _LANES), lambda i: (i, 0)),
        # The slab is a jit-internal temporary (result of pad/reshape), so it
        # is safe to donate; this avoids a second full-size HBM allocation.
        input_output_aliases={0: 0},
        compiler_params=pltpu.CompilerParams(
            # Parallel grid axis: lets both v7x TensorCores split the copy;
            # harmless/neutral on single-core v5e/v6e.
            dimension_semantics=("parallel",),
        ),
    )(x2d)

    out_flat = out2d.reshape(-1)
    if padded_total != total:
        out_flat = out_flat[:total]
    return out_flat.reshape(orig_shape)


if __name__ == "__main__":
    key = jax.random.PRNGKey(0)

    # Small NCHW input consistent with a face-recognition image batch.
    x = jax.random.normal(key, (2, 4, 16, 16), dtype=jnp.float32)
    y = siamese_forward(x)
    jax.block_until_ready(y)
    assert y.shape == x.shape and y.dtype == x.dtype
    assert jnp.array_equal(y, x)

    # Also exercise the ragged (non-multiple-of-128) padding path.
    x2 = jax.random.normal(jax.random.PRNGKey(1), (1, 3, 10, 10), dtype=jnp.float32)
    y2 = siamese_forward(x2)
    jax.block_until_ready(y2)
    assert y2.shape == x2.shape
    assert jnp.array_equal(y2, x2)

    print("KERNEL_OK")
</pallas_src>

<mosaic_0001>
module attributes {stable_mosaic.version = 11 : i64} {
  func.func @_copy_kernel(%arg0: i32, %arg1: memref<8x512xf32, #tpu.memory_space<vmem>>, %arg2: memref<8x512xf32, #tpu.memory_space<vmem>>) attributes {dimension_semantics = [#tpu.dimension_semantics<parallel>], iteration_bounds = array<i64: 1>, scalar_prefetch = 0 : i64, scratch_operands = 0 : i64, tpu.core_type = #tpu.core_type<tc>, window_params = [{transform_indices = @transform_0, window_bounds = array<i64: 8, 512>}, {transform_indices = @transform_1, window_bounds = array<i64: 8, 512>}]} {
    %c0 = arith.constant 0 : index
    %c0_0 = arith.constant 0 : index
    %0 = vector.load %arg1[%c0, %c0_0] : memref<8x512xf32, #tpu.memory_space<vmem>>, vector<8x512xf32>
    %c0_1 = arith.constant 0 : index
    %c0_2 = arith.constant 0 : index
    %1 = vector.load %arg2[%c0_1, %c0_2] : memref<8x512xf32, #tpu.memory_space<vmem>>, vector<8x512xf32>
    tpu.vector_store %arg2[%c0_1, %c0_2], %0 {strides = array<i32>} : memref<8x512xf32, #tpu.memory_space<vmem>>, vector<8x512xf32>,
    return
  }
  func.func @transform_0(%arg0: i32) -> (i32, i32) {
    %c0_i32 = arith.constant 0 : i32
    %c0_i32_0 = arith.constant 0 : i32
    return %arg0, %c0_i32 : i32, i32
  }
  func.func @transform_1(%arg0: i32) -> (i32, i32) {
    %c0_i32 = arith.constant 0 : i32
    %c0_i32_0 = arith.constant 0 : i32
    return %arg0, %c0_i32 : i32, i32
  }
}

</mosaic_0001>

<llo_original>
// kernel: siamese_forward.1
$region0: #{siamese_forward.1}
  #allocation0 [shape = 'u32[]', space=smem, size = 0x4, offset = 0x4, fixed_abs, tag = 'smem constant byte address 0x4 - core index']
  #allocation1 [shape = 'u32[144,128]{1,0:T(1,128)}', space=vmem, size = 0x12000, scoped, tag = 'internal scratch']
  %s0 = inlined_call_operand.vmem [shape: f32[8,512], index: 0, kind: input, shape index: {}, may-alias: {0,1}]
  %s1 = inlined_call_operand.vmem [shape: f32[8,512], index: 1, kind: output, shape index: {}, may-alias: {0,1}]
  %s2 = sld [smem:[#allocation0]]
  $region14: #{siamese_forward.1} parent=0
    _
  %s4 = ssub.s32 1, %s2
  %s5 = scalar_select 0, %s4, %s2
  // Predicated region
  $region2: #{siamese_forward.1} parent=0 // pred_check
    _
  $region3: #{siamese_forward.1} parent=0 // pred_check_branch
    %7 = sbr.rel (0) target = $region5
  $region4: #{siamese_forward.1} parent=0 // pred_region
    _
  $region5: #{siamese_forward.1} parent=0 // pred_fallthru
    _
  %v8 = vld [vmem:[%s0] sm:$0xff]
  %v9 = vld [vmem:[%s0 + $0x8] sm:$0xff]
  %v10 = vld [vmem:[%s0 + $0x10] sm:$0xff]
  %v11 = vld [vmem:[%s0 + $0x18] sm:$0xff]
  %12 = vst [vmem:[%s1] sm:$0xff] %v8
  %13 = vst [vmem:[%s1 + $0x8] sm:$0xff] %v9
  %14 = vst [vmem:[%s1 + $0x10] sm:$0xff] %v10
  %15 = vst [vmem:[%s1 + $0x18] sm:$0xff] %v11
  // Predicated region
  $region6: #{siamese_forward.1} parent=0 // pred_check
    _
  $region7: #{siamese_forward.1} parent=0 // pred_check_branch
    %17 = sbr.rel (0) target = $region9
  $region8: #{siamese_forward.1} parent=0 // pred_region
    _
  $region9: #{siamese_forward.1} parent=0 // pred_fallthru
    _
  // Predicated region
  $region10: #{siamese_forward.1} parent=0 // pred_check
    _
  $region11: #{siamese_forward.1} parent=0 // pred_check_branch
    %19 = sbr.rel (0) target = $region13
  $region12: #{siamese_forward.1} parent=0 // pred_region
    _
  $region13: #{siamese_forward.1} parent=0 // pred_fallthru
    _

</llo_original>
